<compile_context>
chip_gen: v6e
topology: v6e:2x2x1
jax: 0.10.0
libtpu: 0.0.40
codegen_flags: <defaults>
</compile_context>

<pallas_src>
import functools

import jax
import jax.numpy as jnp
from jax.experimental import pallas as pl
from jax.experimental.pallas import tpu as pltpu


# ---------------------------------------------------------------------------
# Kernel: fused geometry-feature compute + channel concat for one (TS, L) tile.
# ---------------------------------------------------------------------------
def _geometry_kernel(p_ref, z_ref, v_ref, u_ref, o_ref):
    # p_ref: SMEM (4,) f32 = [Ax, Bx, Ay, By]
    ax, bx = p_ref[0], p_ref[1]
    ay, by = p_ref[2], p_ref[3]

    z = z_ref[0].astype(jnp.float32)          # (TS, L)
    v = v_ref[0].astype(jnp.float32)
    u = u_ref[0].astype(jnp.float32)

    x = z * (ax * v + bx)
    y = z * (ay * u + by)

    od = o_ref.dtype
    # Fused "torch.cat((x, y, z), 1)": each channel plane is a full-tile store.
    o_ref[0, 0] = x.astype(od)
    o_ref[0, 1] = y.astype(od)
    o_ref[0, 2] = z.astype(od)


def _choose_lane(m):
    """Pick a lane width (multiple of 128) dividing m; otherwise pad to 128."""
    for lane in (1024, 512, 256, 128):
        if m % lane == 0:
            return lane, False
    return 128, True


# ---------------------------------------------------------------------------
# Wrapper: layout plumbing only (reshapes of contiguous data are free).
# ---------------------------------------------------------------------------
@functools.partial(jax.jit, static_argnames=("target_tile_bytes",))
def geometry_feature(z, vnorm, unorm, h, w, ch, cw, fh, fw, *,
                     target_tile_bytes=1 << 20):
    """Pallas GeometryFeature forward.

    z, vnorm, unorm : (N, C, H, W) arrays (typically C == 1)
    h, w, ch, cw, fh, fw : scalar camera / image parameters
    Returns (N, 3*C, H, W) = cat((x, y, z), dim=1), matching the PyTorch module.
    """
    # TODO(synk): per-batch (B,1,1,1) camera-intrinsic tensors are not supported;
    # scalar intrinsics only (the common use of this module).
    n, c, hh, ww = z.shape
    m = c * hh * ww
    out_dtype = z.dtype

    lane, needs_pad = _choose_lane(m)
    m_pad = pl.cdiv(m, lane) * lane

    z2 = z.reshape(n, m)
    v2 = vnorm.reshape(n, m)
    u2 = unorm.reshape(n, m)
    if needs_pad:
        # TODO(synk): this pad costs one extra HBM pass per input; only hit when
        # C*H*W is not a multiple of 128.
        pad = m_pad - m
        z2 = jnp.pad(z2, ((0, 0), (0, pad)))
        v2 = jnp.pad(v2, ((0, 0), (0, pad)))
        u2 = jnp.pad(u2, ((0, 0), (0, pad)))

    rows = m_pad // lane
    z3 = z2.reshape(n, rows, lane)
    v3 = v2.reshape(n, rows, lane)
    u3 = u2.reshape(n, rows, lane)

    # Rows per tile: ~target_tile_bytes of f32 per input tile, sublane-aligned.
    ts = max(8, target_tile_bytes // (4 * lane))
    if ts >= rows:
        ts = rows                      # full extent is always a legal block dim
    else:
        ts = (ts // 8) * 8             # keep sublane-dense (multiple of 8)
    grid = (n, pl.cdiv(rows, ts))

    # Hoisted scalar algebra: x = z*(Ax*v + Bx), y = z*(Ay*u + By).
    hf = jnp.asarray(h, jnp.float32)
    wf = jnp.asarray(w, jnp.float32)
    chf = jnp.asarray(ch, jnp.float32)
    cwf = jnp.asarray(cw, jnp.float32)
    fhf = jnp.asarray(fh, jnp.float32)
    fwf = jnp.asarray(fw, jnp.float32)
    params = jnp.stack([0.5 * hf / fhf, (0.5 * hf - chf) / fhf,
                        0.5 * wf / fwf, (0.5 * wf - cwf) / fwf])

    out = pl.pallas_call(
        _geometry_kernel,
        out_shape=jax.ShapeDtypeStruct((n, 3, rows, lane), out_dtype),
        grid=grid,
        in_specs=[
            pl.BlockSpec(memory_space=pltpu.MemorySpace.SMEM),        # scalars
            pl.BlockSpec((1, ts, lane), lambda b, j: (b, j, 0)),      # z
            pl.BlockSpec((1, ts, lane), lambda b, j: (b, j, 0)),      # vnorm
            pl.BlockSpec((1, ts, lane), lambda b, j: (b, j, 0)),      # unorm
        ],
        out_specs=pl.BlockSpec((1, 3, ts, lane), lambda b, j: (b, 0, j, 0)),
        compiler_params=pltpu.CompilerParams(
            dimension_semantics=("parallel", "parallel")),
    )(params, z3, v3, u3)

    # (N, 3, rows, L) -> (N, 3, C*H*W) -> (N, 3*C, H, W): reshapes of contiguous
    # data, identical to torch.cat((x, y, z), dim=1) for any C.
    out = out.reshape(n, 3, m_pad)
    if needs_pad:
        out = out[:, :, :m]
    return out.reshape(n, 3 * c, hh, ww)


# ---------------------------------------------------------------------------
# Pure-JAX reference (mirrors the PyTorch forward) for a correctness check.
# ---------------------------------------------------------------------------
def reference_forward(z, vnorm, unorm, h, w, ch, cw, fh, fw):
    x = z * (0.5 * h * (vnorm + 1.0) - ch) / fh
    y = z * (0.5 * w * (unorm + 1.0) - cw) / fw
    return jnp.concatenate([x, y, z], axis=1)


# ---------------------------------------------------------------------------
if __name__ == "__main__":
    N, C, H, W = 2, 1, 64, 128          # small demo; C*H*W = 8192 -> (8,1024) tiles

    key = jax.random.PRNGKey(0)
    kz, kv, ku = jax.random.split(key, 3)

    z = jax.random.uniform(kz, (N, C, H, W), jnp.float32, 0.5, 10.0)   # depth
    vnorm = jax.random.uniform(kv, (N, C, H, W), jnp.float32, -1.0, 1.0)
    unorm = jax.random.uniform(ku, (N, C, H, W), jnp.float32, -1.0, 1.0)

    # Camera / image parameters (scalars, as in the module's typical usage).
    h_img, w_img = 352.0, 1216.0
    ch_, cw_ = 176.0, 608.0
    fh_, fw_ = 520.0, 520.0

    out = geometry_feature(z, vnorm, unorm, h_img, w_img, ch_, cw_, fh_, fw_)
    out = jax.block_until_ready(out)

    ref = jax.block_until_ready(
        reference_forward(z, vnorm, unorm, h_img, w_img, ch_, cw_, fh_, fw_))

    assert out.shape == (N, 3 * C, H, W), out.shape
    err = jnp.max(jnp.abs(out - ref))
    # Hoisted scalar algebra changes rounding by ~1-2 ulp vs the reference.
    assert jnp.allclose(out, ref, atol=1e-4, rtol=1e-5), f"max err {err}"

    print("KERNEL_OK")
</pallas_src>

<mosaic_0001>
module attributes {stable_mosaic.version = 11 : i64} {
  func.func @_geometry_kernel(%arg0: i32, %arg1: i32, %arg2: memref<4xf32, #tpu.memory_space<smem>>, %arg3: memref<1x8x1024xf32, #tpu.memory_space<vmem>>, %arg4: memref<1x8x1024xf32, #tpu.memory_space<vmem>>, %arg5: memref<1x8x1024xf32, #tpu.memory_space<vmem>>, %arg6: memref<1x3x8x1024xf32, #tpu.memory_space<vmem>>) attributes {dimension_semantics = [#tpu.dimension_semantics<parallel>, #tpu.dimension_semantics<parallel>], iteration_bounds = array<i64: 2, 1>, scalar_prefetch = 0 : i64, scratch_operands = 0 : i64, tpu.core_type = #tpu.core_type<tc>, window_params = [{transform_indices = @transform_0, window_bounds = array<i64: 4>}, {transform_indices = @transform_1, window_bounds = array<i64: 1, 8, 1024>}, {transform_indices = @transform_2, window_bounds = array<i64: 1, 8, 1024>}, {transform_indices = @transform_3, window_bounds = array<i64: 1, 8, 1024>}, {transform_indices = @transform_4, window_bounds = array<i64: 1, 3, 8, 1024>}]} {
    %c0 = arith.constant 0 : index
    %0 = memref.load %arg2[%c0] : memref<4xf32, #tpu.memory_space<smem>>
    %c1 = arith.constant 1 : index
    %1 = memref.load %arg2[%c1] : memref<4xf32, #tpu.memory_space<smem>>
    %c2 = arith.constant 2 : index
    %2 = memref.load %arg2[%c2] : memref<4xf32, #tpu.memory_space<smem>>
    %c3 = arith.constant 3 : index
    %3 = memref.load %arg2[%c3] : memref<4xf32, #tpu.memory_space<smem>>
    %c0_0 = arith.constant 0 : index
    %c0_1 = arith.constant 0 : index
    %c0_2 = arith.constant 0 : index
    %4 = vector.load %arg3[%c0_0, %c0_1, %c0_2] : memref<1x8x1024xf32, #tpu.memory_space<vmem>>, vector<1x8x1024xf32>
    %5 = vector.shape_cast %4 : vector<1x8x1024xf32> to vector<8x1024xf32>
    %c0_3 = arith.constant 0 : index
    %c0_4 = arith.constant 0 : index
    %c0_5 = arith.constant 0 : index
    %6 = vector.load %arg4[%c0_3, %c0_4, %c0_5] : memref<1x8x1024xf32, #tpu.memory_space<vmem>>, vector<1x8x1024xf32>
    %7 = vector.shape_cast %6 : vector<1x8x1024xf32> to vector<8x1024xf32>
    %c0_6 = arith.constant 0 : index
    %c0_7 = arith.constant 0 : index
    %c0_8 = arith.constant 0 : index
    %8 = vector.load %arg5[%c0_6, %c0_7, %c0_8] : memref<1x8x1024xf32, #tpu.memory_space<vmem>>, vector<1x8x1024xf32>
    %9 = vector.shape_cast %8 : vector<1x8x1024xf32> to vector<8x1024xf32>
    %10 = vector.broadcast %0 : f32 to vector<8x1024xf32>
    %11 = arith.mulf %10, %7 : vector<8x1024xf32>
    %12 = vector.broadcast %1 : f32 to vector<8x1024xf32>
    %13 = arith.addf %11, %12 : vector<8x1024xf32>
    %14 = arith.mulf %5, %13 : vector<8x1024xf32>
    %15 = vector.broadcast %2 : f32 to vector<8x1024xf32>
    %16 = arith.mulf %15, %9 : vector<8x1024xf32>
    %17 = vector.broadcast %3 : f32 to vector<8x1024xf32>
    %18 = arith.addf %16, %17 : vector<8x1024xf32>
    %19 = arith.mulf %5, %18 : vector<8x1024xf32>
    %c0_9 = arith.constant 0 : index
    %c0_10 = arith.constant 0 : index
    %c0_11 = arith.constant 0 : index
    %c0_12 = arith.constant 0 : index
    %20 = vector.load %arg6[%c0_9, %c0_10, %c0_11, %c0_12] : memref<1x3x8x1024xf32, #tpu.memory_space<vmem>>, vector<1x1x8x1024xf32>
    %21 = vector.shape_cast %20 : vector<1x1x8x1024xf32> to vector<8x1024xf32>
    %22 = vector.shape_cast %14 : vector<8x1024xf32> to vector<1x1x8x1024xf32>
    tpu.vector_store %arg6[%c0_9, %c0_10, %c0_11, %c0_12], %22 {strides = array<i32>} : memref<1x3x8x1024xf32, #tpu.memory_space<vmem>>, vector<1x1x8x1024xf32>,
    %c0_13 = arith.constant 0 : index
    %c1_14 = arith.constant 1 : index
    %c0_15 = arith.constant 0 : index
    %c0_16 = arith.constant 0 : index
    %23 = vector.load %arg6[%c0_13, %c1_14, %c0_15, %c0_16] : memref<1x3x8x1024xf32, #tpu.memory_space<vmem>>, vector<1x1x8x1024xf32>
    %24 = vector.shape_cast %23 : vector<1x1x8x1024xf32> to vector<8x1024xf32>
    %25 = vector.shape_cast %19 : vector<8x1024xf32> to vector<1x1x8x1024xf32>
    tpu.vector_store %arg6[%c0_13, %c1_14, %c0_15, %c0_16], %25 {strides = array<i32>} : memref<1x3x8x1024xf32, #tpu.memory_space<vmem>>, vector<1x1x8x1024xf32>,
    %c0_17 = arith.constant 0 : index
    %c2_18 = arith.constant 2 : index
    %c0_19 = arith.constant 0 : index
    %c0_20 = arith.constant 0 : index
    %26 = vector.load %arg6[%c0_17, %c2_18, %c0_19, %c0_20] : memref<1x3x8x1024xf32, #tpu.memory_space<vmem>>, vector<1x1x8x1024xf32>
    %27 = vector.shape_cast %26 : vector<1x1x8x1024xf32> to vector<8x1024xf32>
    %28 = vector.shape_cast %5 : vector<8x1024xf32> to vector<1x1x8x1024xf32>
    tpu.vector_store %arg6[%c0_17, %c2_18, %c0_19, %c0_20], %28 {strides = array<i32>} : memref<1x3x8x1024xf32, #tpu.memory_space<vmem>>, vector<1x1x8x1024xf32>,
    return
  }
  func.func @transform_0(%arg0: i32, %arg1: i32) -> i32 {
    %c0_i32 = arith.constant 0 : i32
    %c0_i32_0 = arith.constant 0 : i32
    return %c0_i32 : i32
  }
  func.func @transform_1(%arg0: i32, %arg1: i32) -> (i32, i32, i32) {
    %c0_i32 = arith.constant 0 : i32
    %c0_i32_0 = arith.constant 0 : i32
    return %arg0, %arg1, %c0_i32 : i32, i32, i32
  }
  func.func @transform_2(%arg0: i32, %arg1: i32) -> (i32, i32, i32) {
    %c0_i32 = arith.constant 0 : i32
    %c0_i32_0 = arith.constant 0 : i32
    return %arg0, %arg1, %c0_i32 : i32, i32, i32
  }
  func.func @transform_3(%arg0: i32, %arg1: i32) -> (i32, i32, i32) {
    %c0_i32 = arith.constant 0 : i32
    %c0_i32_0 = arith.constant 0 : i32
    return %arg0, %arg1, %c0_i32 : i32, i32, i32
  }
  func.func @transform_4(%arg0: i32, %arg1: i32) -> (i32, i32, i32, i32) {
    %c0_i32 = arith.constant 0 : i32
    %c0_i32_0 = arith.constant 0 : i32
    %c0_i32_1 = arith.constant 0 : i32
    return %arg0, %c0_i32, %arg1, %c0_i32_0 : i32, i32, i32, i32
  }
}

</mosaic_0001>

<llo_original>
// kernel: geometry_feature.1
$region0: #{geometry_feature.1}
  #allocation0 [shape = 'u32[]', space=smem, size = 0x4, offset = 0x4, fixed_abs, tag = 'smem constant byte address 0x4 - core index']
  #allocation1 [shape = 'u32[144,128]{1,0:T(1,128)}', space=vmem, size = 0x12000, scoped, tag = 'internal scratch']
  %s0 = inlined_call_operand.vmem [shape: f32[4], index: 0, kind: input, shape index: {}]
  %s1 = inlined_call_operand.vmem [shape: f32[2,8,1024], index: 1, kind: input, shape index: {}]
  %s2 = inlined_call_operand.vmem [shape: f32[2,8,1024], index: 2, kind: input, shape index: {}]
  %s3 = inlined_call_operand.vmem [shape: f32[2,8,1024], index: 3, kind: input, shape index: {}]
  %s4 = inlined_call_operand.vmem [shape: f32[2,3,8,1024], index: 4, kind: output, shape index: {}]
  %s5 = sld [smem:[#allocation0]]
  $region53: #{geometry_feature.1} parent=0
    _
  %s7 = ssub.s32 1, %s5
  %s8 = scalar_select 0, %s7, %s5
  $region1: #{geometry_feature.1} parent=0
    #allocation2 [shape = 'u8[512]{0}', space=smem, size = 0x200, scoped, tag = 'input window, operand 0, single buffered']
    #allocation3 [shape = 's32[2]{0}', space=sflag, size = 0x8, scoped, tag = 'scoped memory for geometry_feature.1']
    %9 = vsyncpa [#allocation3], 0
    loop: start=0, step=1, limit=4
    $region2: #{geometry_feature.1} parent=1 // loop_pre_header
      _
    $region3: #{geometry_feature.1} parent=1 // loop_header
      %s11 = sphi 0, %s15
      %p12 = scmp.ge.s32.totalorder %s11, 4
      %s18 = sphi 0, %s30
      %s19 = sphi 0, %s26
      %s20 = sphi 0, %s18
      %s21 = sphi 0, %s19
      %s22 = sphi 0, %s20
      %s23 = sphi 0, %s21
      %s31 = sphi 0, %s31
      %s33 = sphi 0, %s31
      %s34 = sphi 0, %s33
      %s48 = sphi 0, %s34
      %s56 = sphi 0, %s58
      %s59 = sphi 0, %s56
      %s60 = sphi 0, %s59
      %s76 = sphi 0, %s60
      %s84 = sphi 0, %s86
      %s87 = sphi 0, %s84
      %s88 = sphi 0, %s87
      %s104 = sphi 0, %s88
      %s112 = sphi 0, %s114
      %s115 = sphi 0, %s112
      %s116 = sphi 0, %s115
      %s132 = sphi 0, %s116
      %s140 = sphi 0, %s142
      %s143 = sphi 0, %s140
      %s144 = sphi 0, %s143
      %s160 = sphi 0, %s144
    $region4: #{geometry_feature.1} parent=1 // loop_header_branch
      %14 = sbr.rel (%p12) target = $region8
    $region5: #{geometry_feature.1} parent=1 // loop_body
      %s16 = ssub.s32 %s11, 1
      %s17 = ssub.s32 %s11, 2
      %s24 = sadd.s32 1, %s19
      %p25 = scmp.ge.s32.totalorder %s24, 1
      %s26 = scalar_select %p25, 0, %s24
      %s27 = sadd.s32 1, %s18
      %s28 = scalar_select %p25, %s27, %s18
      %p29 = scmp.ge.s32.totalorder %s28, 2
      %s30 = scalar_select %p29, 0, %s28
      %s32 = sadd.s32 %s31, 1
      %p35 = scmp.eq.s32.totalorder %s11, 1
      %p36 = scmp.ne.s32.totalorder %s31, %s33
      %p37 = scmp.eq.s32.totalorder %s11, 0
      %p38 = por %p36, %p37
      %p39 = scmp.ne.s32.totalorder %s31, %s33
      %p40 = scmp.eq.s32.totalorder %s16, 1
      %p41 = por %p39, %p40
      %p42 = scmp.ne.s32.totalorder %s33, %s34
      %p43 = scmp.eq.s32.totalorder %s16, 0
      %p44 = por %p42, %p43
      %p45 = scmp.ne.s32.totalorder %s33, %s34
      %p46 = scmp.eq.s32.totalorder %s17, 1
      %p47 = por %p45, %p46
      %p49 = scmp.ne.s32.totalorder %s34, %s48
      %p50 = scmp.eq.s32.totalorder %s17, 0
      %p51 = por %p49, %p50
      %s52 = ssub.s32 %s18, %s30
      %s53 = ssub.s32 %s19, %s26
      %s54 = sor.u32 %s52, %s53
      %p55 = scmp.eq.s32.totalorder %s54, 0
      %s57 = sadd.s32 %s56, 1
      %s58 = scalar_select %p55, %s56, %s57
      %p61 = pneg %p55
      %p62 = scmp.eq.s32.totalorder %s11, 1
      %p63 = por %p61, %p62
      %p64 = scmp.ne.s32.totalorder %s56, %s59
      %p65 = scmp.eq.s32.totalorder %s11, 0
      %p66 = por %p64, %p65
      %p67 = scmp.ne.s32.totalorder %s56, %s59
      %p68 = scmp.eq.s32.totalorder %s16, 1
      %p69 = por %p67, %p68
      %p70 = scmp.ne.s32.totalorder %s59, %s60
      %p71 = scmp.eq.s32.totalorder %s16, 0
      %p72 = por %p70, %p71
      %p73 = scmp.ne.s32.totalorder %s59, %s60
      %p74 = scmp.eq.s32.totalorder %s17, 1
      %p75 = por %p73, %p74
      %p77 = scmp.ne.s32.totalorder %s60, %s76
      %p78 = scmp.eq.s32.totalorder %s17, 0
      %p79 = por %p77, %p78
      %s80 = ssub.s32 %s18, %s30
      %s81 = ssub.s32 %s19, %s26
      %s82 = sor.u32 %s80, %s81
      %p83 = scmp.eq.s32.totalorder %s82, 0
      %s85 = sadd.s32 %s84, 1
      %s86 = scalar_select %p83, %s84, %s85
      %p89 = pneg %p83
      %p90 = scmp.eq.s32.totalorder %s11, 1
      %p91 = por %p89, %p90
      %p92 = scmp.ne.s32.totalorder %s84, %s87
      %p93 = scmp.eq.s32.totalorder %s11, 0
      %p94 = por %p92, %p93
      %p95 = scmp.ne.s32.totalorder %s84, %s87
      %p96 = scmp.eq.s32.totalorder %s16, 1
      %p97 = por %p95, %p96
      %p98 = scmp.ne.s32.totalorder %s87, %s88
      %p99 = scmp.eq.s32.totalorder %s16, 0
      %p100 = por %p98, %p99
      %p101 = scmp.ne.s32.totalorder %s87, %s88
      %p102 = scmp.eq.s32.totalorder %s17, 1
      %p103 = por %p101, %p102
      %p105 = scmp.ne.s32.totalorder %s88, %s104
      %p106 = scmp.eq.s32.totalorder %s17, 0
      %p107 = por %p105, %p106
      %s108 = ssub.s32 %s18, %s30
      %s109 = ssub.s32 %s19, %s26
      %s110 = sor.u32 %s108, %s109
      %p111 = scmp.eq.s32.totalorder %s110, 0
      %s113 = sadd.s32 %s112, 1
      %s114 = scalar_select %p111, %s112, %s113
      %p117 = pneg %p111
      %p118 = scmp.eq.s32.totalorder %s11, 1
      %p119 = por %p117, %p118
      %p120 = scmp.ne.s32.totalorder %s112, %s115
      %p121 = scmp.eq.s32.totalorder %s11, 0
      %p122 = por %p120, %p121
      %p123 = scmp.ne.s32.totalorder %s112, %s115
      %p124 = scmp.eq.s32.totalorder %s16, 1
      %p125 = por %p123, %p124
      %p126 = scmp.ne.s32.totalorder %s115, %s116
      %p127 = scmp.eq.s32.totalorder %s16, 0
      %p128 = por %p126, %p127
      %p129 = scmp.ne.s32.totalorder %s115, %s116
      %p130 = scmp.eq.s32.totalorder %s17, 1
      %p131 = por %p129, %p130
      %p133 = scmp.ne.s32.totalorder %s116, %s132
      %p134 = scmp.eq.s32.totalorder %s17, 0
      %p135 = por %p133, %p134
      %s136 = ssub.s32 %s18, %s30
      %s137 = ssub.s32 %s19, %s26
      %s138 = sor.u32 %s136, %s137
      %p139 = scmp.eq.s32.totalorder %s138, 0
      %s141 = sadd.s32 %s140, 1
      %s142 = scalar_select %p139, %s140, %s141
      %p145 = pneg %p139
      %p146 = scmp.eq.s32.totalorder %s11, 1
      %p147 = por %p145, %p146
      %p148 = scmp.ne.s32.totalorder %s140, %s143
      %p149 = scmp.eq.s32.totalorder %s11, 0
      %p150 = por %p148, %p149
      %p151 = scmp.ne.s32.totalorder %s140, %s143
      %p152 = scmp.eq.s32.totalorder %s16, 1
      %p153 = por %p151, %p152
      %p154 = scmp.ne.s32.totalorder %s143, %s144
      %p155 = scmp.eq.s32.totalorder %s16, 0
      %p156 = por %p154, %p155
      %p157 = scmp.ne.s32.totalorder %s143, %s144
      %p158 = scmp.eq.s32.totalorder %s17, 1
      %p159 = por %p157, %p158
      %p161 = scmp.ne.s32.totalorder %s144, %s160
      %p162 = scmp.eq.s32.totalorder %s17, 0
      %p163 = por %p161, %p162
      %p164 = scmp.le.s32.totalorder 1, %s11
      %p165 = scmp.lt.s32.totalorder %s11, 3
      %p166 = pnand %p164, %p165
      %p167 = pneg %p166
      // Predicated region
      $region9: #{geometry_feature.1} parent=5 // pred_check
        _
      $region10: #{geometry_feature.1} parent=5 // pred_check_branch
        %169 = sbr.rel (%p166) target = $region12
      $region11: #{geometry_feature.1} parent=5 // pred_region
        %s170 = ssub.s32 %s11, 1
        // Predicated region
        $region13: #{geometry_feature.1} parent=11 // pred_check
          %p171 = pneg %p44
        $region14: #{geometry_feature.1} parent=11 // pred_check_branch
          %173 = sbr.rel (%p171) target = $region16
        $region15: #{geometry_feature.1} parent=11 // pred_region
          %s175 = ssub.s32 16, 16
          %176 = vsyncadd [#allocation3], %s175
          %s178 = sshll.u32 %s0, 4
          %s179 = int_to_ptr.vmem [resolvable:$true] %s178
          %181 = dma.vmem_to_smem %s179, 16, [#allocation2], [#allocation3]
        $region16: #{geometry_feature.1} parent=11 // pred_fallthru
          _
      $region12: #{geometry_feature.1} parent=5 // pred_fallthru
        _
      %p182 = scmp.lt.s32.totalorder %s11, 2
      // Predicated region
      $region17: #{geometry_feature.1} parent=5 // pred_check
        %p183 = pneg %p182
      $region18: #{geometry_feature.1} parent=5 // pred_check_branch
        %185 = sbr.rel (%p183) target = $region20
      $region19: #{geometry_feature.1} parent=5 // pred_region
        // Predicated region
        $region21: #{geometry_feature.1} parent=19 // pred_check
          %p186 = pneg %p66
        $region22: #{geometry_feature.1} parent=19 // pred_check_branch
          %188 = sbr.rel (%p186) target = $region24
        $region23: #{geometry_feature.1} parent=19 // pred_region
          %p189 = scmp.lt.s32.totalorder %s18, 1
          %s190 = scalar_select %p189, %s18, 1
          %p191 = scmp.lt.s32.totalorder %s19, 0
          %s192 = scalar_select %p191, %s19, 0
          %s193 = smul.addr %s192, 8
          %s194 = smul.addr %s190, 8
          %s195 = sadd.s32 %s193, %s194
          %s196 = smul.addr %s195, 8
          %s197 = scalar_lea.vmem %s1, %s196
        $region24: #{geometry_feature.1} parent=19 // pred_fallthru
          _
        // Predicated region
        $region25: #{geometry_feature.1} parent=19 // pred_check
          %p198 = pneg %p94
        $region26: #{geometry_feature.1} parent=19 // pred_check_branch
          %200 = sbr.rel (%p198) target = $region28
        $region27: #{geometry_feature.1} parent=19 // pred_region
          %p201 = scmp.lt.s32.totalorder %s18, 1
          %s202 = scalar_select %p201, %s18, 1
          %p203 = scmp.lt.s32.totalorder %s19, 0
          %s204 = scalar_select %p203, %s19, 0
          %s205 = smul.addr %s204, 8
          %s206 = smul.addr %s202, 8
          %s207 = sadd.s32 %s205, %s206
          %s208 = smul.addr %s207, 8
          %s209 = scalar_lea.vmem %s2, %s208
        $region28: #{geometry_feature.1} parent=19 // pred_fallthru
          _
        // Predicated region
        $region29: #{geometry_feature.1} parent=19 // pred_check
          %p210 = pneg %p122
        $region30: #{geometry_feature.1} parent=19 // pred_check_branch
          %212 = sbr.rel (%p210) target = $region32
        $region31: #{geometry_feature.1} parent=19 // pred_region
          %p213 = scmp.lt.s32.totalorder %s18, 1
          %s214 = scalar_select %p213, %s18, 1
          %p215 = scmp.lt.s32.totalorder %s19, 0
          %s216 = scalar_select %p215, %s19, 0
          %s217 = smul.addr %s216, 8
          %s218 = smul.addr %s214, 8
          %s219 = sadd.s32 %s217, %s218
          %s220 = smul.addr %s219, 8
          %s221 = scalar_lea.vmem %s3, %s220
        $region32: #{geometry_feature.1} parent=19 // pred_fallthru
          _
      $region20: #{geometry_feature.1} parent=5 // pred_fallthru
        _
      %p222 = scmp.le.s32.totalorder 1, %s11
      %p223 = scmp.lt.s32.totalorder %s11, 3
      %p224 = pnand %p222, %p223
      %p225 = pneg %p224
      // Predicated region
      $region33: #{geometry_feature.1} parent=5 // pred_check
        _
      $region34: #{geometry_feature.1} parent=5 // pred_check_branch
        %227 = sbr.rel (%p224) target = $region36
      $region35: #{geometry_feature.1} parent=5 // pred_region
        %s228 = ssub.s32 %s11, 1
        // Predicated region
        $region37: #{geometry_feature.1} parent=35 // pred_check
          %p229 = pneg %p44
        $region38: #{geometry_feature.1} parent=35 // pred_check_branch
          %231 = sbr.rel (%p229) target = $region40
        $region39: #{geometry_feature.1} parent=35 // pred_region
          %232 = dma.done [#allocation3], 16
        $region40: #{geometry_feature.1} parent=35 // pred_fallthru
          _
        %233 = sfence
        %p234 = pneg %p44
        %p235 = pneg %p41
        %p236 = scmp.lt.s32.totalorder %s20, 1
        %s237 = scalar_select %p236, %s20, 1
        %p238 = scmp.lt.s32.totalorder %s21, 0
        %s239 = scalar_select %p238, %s21, 0
        %s240 = smul.addr %s239, 8
        %s241 = smul.addr %s237, 8
        %s242 = sadd.s32 %s240, %s241
        %s243 = smul.addr %s242, 8
        %s244 = scalar_lea.vmem %s1, %s243
        %p245 = pneg %p72
        %p246 = pneg %p69
        %p247 = scmp.lt.s32.totalorder %s20, 1
        %s248 = scalar_select %p247, %s20, 1
        %p249 = scmp.lt.s32.totalorder %s21, 0
        %s250 = scalar_select %p249, %s21, 0
        %s251 = smul.addr %s250, 8
        %s252 = smul.addr %s248, 8
        %s253 = sadd.s32 %s251, %s252
        %s254 = smul.addr %s253, 8
        %s255 = scalar_lea.vmem %s2, %s254
        %p256 = pneg %p100
        %p257 = pneg %p97
        %p258 = scmp.lt.s32.totalorder %s20, 1
        %s259 = scalar_select %p258, %s20, 1
        %p260 = scmp.lt.s32.totalorder %s21, 0
        %s261 = scalar_select %p260, %s21, 0
        %s262 = smul.addr %s261, 8
        %s263 = smul.addr %s259, 8
        %s264 = sadd.s32 %s262, %s263
        %s265 = smul.addr %s264, 8
        %s266 = scalar_lea.vmem %s3, %s265
        %p267 = pneg %p128
        %p268 = pneg %p125
        %p269 = pneg %p156
        %p270 = pneg %p153
        %p271 = scmp.lt.s32.totalorder %s20, 1
        %s272 = scalar_select %p271, %s20, 1
        %p273 = scmp.lt.s32.totalorder %s21, 0
        %s274 = scalar_select %p273, %s21, 0
        %s275 = smul.addr %s274, 8
        %s276 = smul.addr %s272, 24
        %s277 = sadd.s32 %s275, %s276
        %s278 = smul.addr %s277, 8
        %s279 = scalar_lea.vmem %s4, %s278
        %p280 = scmp.lt.s32.totalorder %s20, 1
        %s281 = scalar_select %p280, %s20, 1
        %p282 = scmp.lt.s32.totalorder %s21, 0
        %s283 = scalar_select %p282, %s21, 0
        %s284 = smul.addr %s283, 8
        %s285 = smul.addr %s281, 8
        %s286 = sadd.s32 %s284, %s285
        %s287 = smul.addr %s286, 8
        %s288 = scalar_lea.vmem %s1, %s287
        %p289 = scmp.lt.s32.totalorder %s20, 1
        %s290 = scalar_select %p289, %s20, 1
        %p291 = scmp.lt.s32.totalorder %s21, 0
        %s292 = scalar_select %p291, %s21, 0
        %s293 = smul.addr %s292, 8
        %s294 = smul.addr %s290, 8
        %s295 = sadd.s32 %s293, %s294
        %s296 = smul.addr %s295, 8
        %s297 = scalar_lea.vmem %s2, %s296
        %p298 = scmp.lt.s32.totalorder %s20, 1
        %s299 = scalar_select %p298, %s20, 1
        %p300 = scmp.lt.s32.totalorder %s21, 0
        %s301 = scalar_select %p300, %s21, 0
        %s302 = smul.addr %s301, 8
        %s303 = smul.addr %s299, 8
        %s304 = sadd.s32 %s302, %s303
        %s305 = smul.addr %s304, 8
        %s306 = scalar_lea.vmem %s3, %s305
        %p307 = scmp.lt.s32.totalorder %s20, 1
        %s308 = scalar_select %p307, %s20, 1
        %p309 = scmp.lt.s32.totalorder %s21, 0
        %s310 = scalar_select %p309, %s21, 0
        %s311 = smul.addr %s310, 8
        %s312 = smul.addr %s308, 24
        %s313 = sadd.s32 %s311, %s312
        %s314 = smul.addr %s313, 8
        %s315 = scalar_lea.vmem %s4, %s314
        %s316 = sld [smem:[#allocation2]]
        %s317 = sld [smem:[#allocation2 + $0x1]]
        %s318 = sld [smem:[#allocation2 + $0x2]]
        %s319 = sld [smem:[#allocation2 + $0x3]]
        %v320 = vld [vmem:[%s288] sm:$0xff]
        %v321 = vld [vmem:[%s288 + $0x8] sm:$0xff]
        %v322 = vld [vmem:[%s288 + $0x10] sm:$0xff]
        %v323 = vld [vmem:[%s288 + $0x18] sm:$0xff]
        %v324 = vld [vmem:[%s288 + $0x20] sm:$0xff]
        %v325 = vld [vmem:[%s288 + $0x28] sm:$0xff]
        %v326 = vld [vmem:[%s288 + $0x30] sm:$0xff]
        %v327 = vld [vmem:[%s288 + $0x38] sm:$0xff]
        %v328 = vld [vmem:[%s297] sm:$0xff]
        %v329 = vld [vmem:[%s297 + $0x8] sm:$0xff]
        %v330 = vld [vmem:[%s297 + $0x10] sm:$0xff]
        %v331 = vld [vmem:[%s297 + $0x18] sm:$0xff]
        %v332 = vld [vmem:[%s297 + $0x20] sm:$0xff]
        %v333 = vld [vmem:[%s297 + $0x28] sm:$0xff]
        %v334 = vld [vmem:[%s297 + $0x30] sm:$0xff]
        %v335 = vld [vmem:[%s297 + $0x38] sm:$0xff]
        %v336 = vld [vmem:[%s306] sm:$0xff]
        %v337 = vld [vmem:[%s306 + $0x8] sm:$0xff]
        %v338 = vld [vmem:[%s306 + $0x10] sm:$0xff]
        %v339 = vld [vmem:[%s306 + $0x18] sm:$0xff]
        %v340 = vld [vmem:[%s306 + $0x20] sm:$0xff]
        %v341 = vld [vmem:[%s306 + $0x28] sm:$0xff]
        %v342 = vld [vmem:[%s306 + $0x30] sm:$0xff]
        %v343 = vld [vmem:[%s306 + $0x38] sm:$0xff]
        %v344 = vstv %s316
        %v345 = vmul.f32 %v344, %v328
        %v346 = vmul.f32 %v344, %v329
        %v347 = vmul.f32 %v344, %v330
        %v348 = vmul.f32 %v344, %v331
        %v349 = vmul.f32 %v344, %v332
        %v350 = vmul.f32 %v344, %v333
        %v351 = vmul.f32 %v344, %v334
        %v352 = vmul.f32 %v344, %v335
        %v353 = vstv %s317
        %v354 = vadd.f32 %v345, %v353
        %v355 = vadd.f32 %v346, %v353
        %v356 = vadd.f32 %v347, %v353
        %v357 = vadd.f32 %v348, %v353
        %v358 = vadd.f32 %v349, %v353
        %v359 = vadd.f32 %v350, %v353
        %v360 = vadd.f32 %v351, %v353
        %v361 = vadd.f32 %v352, %v353
        %v362 = vmul.f32 %v320, %v354
        %v363 = vmul.f32 %v321, %v355
        %v364 = vmul.f32 %v322, %v356
        %v365 = vmul.f32 %v323, %v357
        %v366 = vmul.f32 %v324, %v358
        %v367 = vmul.f32 %v325, %v359
        %v368 = vmul.f32 %v326, %v360
        %v369 = vmul.f32 %v327, %v361
        %v370 = vstv %s318
        %v371 = vmul.f32 %v370, %v336
        %v372 = vmul.f32 %v370, %v337
        %v373 = vmul.f32 %v370, %v338
        %v374 = vmul.f32 %v370, %v339
        %v375 = vmul.f32 %v370, %v340
        %v376 = vmul.f32 %v370, %v341
        %v377 = vmul.f32 %v370, %v342
        %v378 = vmul.f32 %v370, %v343
        %v379 = vstv %s319
        %v380 = vadd.f32 %v371, %v379
        %v381 = vadd.f32 %v372, %v379
        %v382 = vadd.f32 %v373, %v379
        %v383 = vadd.f32 %v374, %v379
        %v384 = vadd.f32 %v375, %v379
        %v385 = vadd.f32 %v376, %v379
        %v386 = vadd.f32 %v377, %v379
        %v387 = vadd.f32 %v378, %v379
        %v388 = vmul.f32 %v320, %v380
        %v389 = vmul.f32 %v321, %v381
        %v390 = vmul.f32 %v322, %v382
        %v391 = vmul.f32 %v323, %v383
        %v392 = vmul.f32 %v324, %v384
        %v393 = vmul.f32 %v325, %v385
        %v394 = vmul.f32 %v326, %v386
        %v395 = vmul.f32 %v327, %v387
        %396 = vst [vmem:[%s315] sm:$0xff] %v362
        %397 = vst [vmem:[%s315 + $0x8] sm:$0xff] %v363
        %398 = vst [vmem:[%s315 + $0x10] sm:$0xff] %v364
        %399 = vst [vmem:[%s315 + $0x18] sm:$0xff] %v365
        %400 = vst [vmem:[%s315 + $0x20] sm:$0xff] %v366
        %401 = vst [vmem:[%s315 + $0x28] sm:$0xff] %v367
        %402 = vst [vmem:[%s315 + $0x30] sm:$0xff] %v368
        %403 = vst [vmem:[%s315 + $0x38] sm:$0xff] %v369
        %s404 = scalar_lea.vmem %s315, 64
        %405 = vst [vmem:[%s404] sm:$0xff] %v388
        %406 = vst [vmem:[%s404 + $0x8] sm:$0xff] %v389
        %407 = vst [vmem:[%s404 + $0x10] sm:$0xff] %v390
        %408 = vst [vmem:[%s404 + $0x18] sm:$0xff] %v391
        %409 = vst [vmem:[%s404 + $0x20] sm:$0xff] %v392
        %410 = vst [vmem:[%s404 + $0x28] sm:$0xff] %v393
        %411 = vst [vmem:[%s404 + $0x30] sm:$0xff] %v394
        %412 = vst [vmem:[%s404 + $0x38] sm:$0xff] %v395
        %s413 = scalar_lea.vmem %s315, 128
        %414 = vst [vmem:[%s413] sm:$0xff] %v320
        %415 = vst [vmem:[%s413 + $0x8] sm:$0xff] %v321
        %416 = vst [vmem:[%s413 + $0x10] sm:$0xff] %v322
        %417 = vst [vmem:[%s413 + $0x18] sm:$0xff] %v323
        %418 = vst [vmem:[%s413 + $0x20] sm:$0xff] %v324
        %419 = vst [vmem:[%s413 + $0x28] sm:$0xff] %v325
        %420 = vst [vmem:[%s413 + $0x30] sm:$0xff] %v326
        %421 = vst [vmem:[%s413 + $0x38] sm:$0xff] %v327
        %p422 = scmp.lt.s32.totalorder %s20, 1
        %s423 = scalar_select %p422, %s20, 1
        %p424 = scmp.lt.s32.totalorder %s21, 0
        %s425 = scalar_select %p424, %s21, 0
        %s426 = smul.addr %s425, 8
        %s427 = smul.addr %s423, 24
        %s428 = sadd.s32 %s426, %s427
        %s429 = smul.addr %s428, 8
        %s430 = scalar_lea.vmem %s4, %s429
        // Predicated region
        $region41: #{geometry_feature.1} parent=35 // pred_check
          %p431 = pneg %p153
        $region42: #{geometry_feature.1} parent=35 // pred_check_branch
          %433 = sbr.rel (%p431) target = $region44
        $region43: #{geometry_feature.1} parent=35 // pred_region
          _
        $region44: #{geometry_feature.1} parent=35 // pred_fallthru
          _
      $region36: #{geometry_feature.1} parent=5 // pred_fallthru
        _
      %p434 = scmp.le.s32.totalorder 2, %s11
      // Predicated region
      $region45: #{geometry_feature.1} parent=5 // pred_check
        %p435 = pneg %p434
      $region46: #{geometry_feature.1} parent=5 // pred_check_branch
        %437 = sbr.rel (%p435) target = $region48
      $region47: #{geometry_feature.1} parent=5 // pred_region
        %s438 = ssub.s32 %s11, 2
        // Predicated region
        $region49: #{geometry_feature.1} parent=47 // pred_check
          %p439 = pneg %p159
        $region50: #{geometry_feature.1} parent=47 // pred_check_branch
          %441 = sbr.rel (%p439) target = $region52
        $region51: #{geometry_feature.1} parent=47 // pred_region
          %p442 = scmp.lt.s32.totalorder %s22, 1
          %s443 = scalar_select %p442, %s22, 1
          %p444 = scmp.lt.s32.totalorder %s23, 0
          %s445 = scalar_select %p444, %s23, 0
          %s446 = smul.addr %s445, 8
          %s447 = smul.addr %s443, 24
          %s448 = sadd.s32 %s446, %s447
          %s449 = smul.addr %s448, 8
          %s450 = scalar_lea.vmem %s4, %s449
        $region52: #{geometry_feature.1} parent=47 // pred_fallthru
          _
      $region48: #{geometry_feature.1} parent=5 // pred_fallthru
        _
    $region6: #{geometry_feature.1} parent=1 // loop_footer
      %s15 = sadd.s32 1, %s11
    $region7: #{geometry_feature.1} parent=1 // loop_footer_branch
      %10 = sbr.rel target = $region3
    $region8: #{geometry_feature.1} parent=1 // loop_exit
      _
    %451 = vsyncpa [#allocation3], 1
    %s452 = scalar_lea.sflag [#allocation3], 1
    %453 = vsyncpa %s452, 1

</llo_original>
